<compile_context>
chip_gen: v7x
topology: tpu7x:2x2x1
jax: 0.10.0
libtpu: 0.0.40
codegen_flags: <defaults>
</compile_context>

<pallas_src>
import functools

import jax
import jax.numpy as jnp
from jax.experimental import pallas as pl
from jax.experimental.pallas import tpu as pltpu


def _not_have_key_kernel(z_ref, out_ref, *, col):
    # z_ref: (TB, d_block) tile in native dtype; `col` is the static in-block
    # lane index of the got_key column.  Keep the slice 2-D so the store is 2-D.
    c = z_ref[:, col:col + 1]                                   # (TB, 1)
    out_ref[...] = jnp.where(c == 0, 0.99, 0.01).astype(out_ref.dtype)


def not_have_key_valuation(z: jax.Array, *, block_b: int | None = None) -> jax.Array:
    """z: (B, d) array (any float dtype, native layout). Returns (B,) float32."""
    B, d = z.shape
    assert d >= 3, "need at least 3 feature columns"
    col = d - 3
    LANES = 128

    # Feature-dim block: only the 128-lane tile that contains column d-3
    # (full feature dim when d <= 128, e.g. the d=9 layout of this module).
    if d > LANES:
        d_block = LANES
        feat_block = col // LANES
        col_in_block = col % LANES
    else:
        d_block = d
        feat_block = 0
        col_in_block = col

    # Batch tile: multiple of the native sublane count for the dtype, sized so
    # the double-buffered input tile stays ~4 MiB (comfortable on v7x's 64 MiB
    # VMEM as well as v5e/v6e's 128 MiB).
    itemsize = jnp.dtype(z.dtype).itemsize
    sublanes = 8 * max(1, 4 // itemsize)          # 8 (f32) / 16 (bf16) / 32 (int8)
    if block_b is None:
        budget_bytes = 4 * 1024 * 1024
        tb = budget_bytes // max(1, 2 * d_block * itemsize)
        tb = max(sublanes, min(2048, (tb // sublanes) * sublanes))
    else:
        tb = block_b
    if tb >= B:
        tb = B                                    # single full-batch block (full dims always legal)

    grid = (pl.cdiv(B, tb),)

    kernel = functools.partial(_not_have_key_kernel, col=col_in_block)

    out = pl.pallas_call(
        kernel,
        out_shape=jax.ShapeDtypeStruct((B, 1), jnp.float32),
        grid=grid,
        in_specs=[pl.BlockSpec((tb, d_block), lambda i, fb=feat_block: (i, fb))],
        out_specs=pl.BlockSpec((tb, 1), lambda i: (i, 0)),
        compiler_params=pltpu.CompilerParams(
            dimension_semantics=("parallel",),    # shard batch tiles across TCs (v7x)
        ),
    )(z)
    return out[:, 0]


def _ref(z):
    return jnp.where(z[:, -3] == 0, 0.99, 0.01).astype(jnp.float32)


if __name__ == "__main__":
    key = jax.random.PRNGKey(0)
    D = 9  # [agent, key, door, blue, green, red, got_key, X, Y]

    # --- Small demo batch (matches the module's layout), float32. ---
    B = 8
    z = jax.random.uniform(key, (B, D), dtype=jnp.float32)
    got_key = (jnp.arange(B) % 2).astype(jnp.float32)   # 0,1,0,1,...
    z = z.at[:, -3].set(got_key)

    result = not_have_key_valuation(z)
    jax.block_until_ready(result)
    assert result.shape == (B,)
    assert jnp.allclose(result, _ref(z)), (result, _ref(z))

    # --- Multi-tile grid path (3 batch tiles, ragged last block), float32. ---
    B2 = 40
    z2 = jax.random.uniform(jax.random.PRNGKey(1), (B2, D), dtype=jnp.float32)
    z2 = z2.at[:, -3].set((jnp.arange(B2) % 3 == 0).astype(jnp.float32))
    r2 = not_have_key_valuation(z2, block_b=16)
    jax.block_until_ready(r2)
    assert jnp.allclose(r2, _ref(z2)), (r2, _ref(z2))

    # --- Native-dtype path (bfloat16 input, no wrapper-side cast). ---
    B3 = 24
    z3 = jax.random.uniform(jax.random.PRNGKey(2), (B3, D),
                            dtype=jnp.float32).astype(jnp.bfloat16)
    z3 = z3.at[:, -3].set(
        jnp.where(jnp.arange(B3) % 2 == 0, 0.0, 1.0).astype(jnp.bfloat16))
    r3 = not_have_key_valuation(z3)
    jax.block_until_ready(r3)
    assert jnp.allclose(r3, _ref(z3)), (r3, _ref(z3))

    print("KERNEL_OK")
</pallas_src>

<mosaic_0001>
module attributes {stable_mosaic.version = 11 : i64} {
  func.func @_not_have_key_kernel(%arg0: i32, %arg1: memref<8x9xf32, #tpu.memory_space<vmem>>, %arg2: memref<8x1xf32, #tpu.memory_space<vmem>>) attributes {dimension_semantics = [#tpu.dimension_semantics<parallel>], iteration_bounds = array<i64: 1>, scalar_prefetch = 0 : i64, scratch_operands = 0 : i64, tpu.core_type = #tpu.core_type<tc>, window_params = [{transform_indices = @transform_0, window_bounds = array<i64: 8, 9>}, {transform_indices = @transform_1, window_bounds = array<i64: 8, 1>}]} {
    %c0 = arith.constant 0 : index
    %c6 = arith.constant 6 : index
    %0 = vector.load %arg1[%c0, %c6] : memref<8x9xf32, #tpu.memory_space<vmem>>, vector<8x1xf32>
    %cst = arith.constant 0.000000e+00 : f32
    %1 = vector.broadcast %cst : f32 to vector<8x1xf32>
    %2 = arith.cmpf oeq, %0, %1 : vector<8x1xf32>
    %cst_0 = arith.constant 9.900000e-01 : f32
    %cst_1 = arith.constant 0.00999999977 : f32
    %3 = vector.broadcast %cst_0 : f32 to vector<8x1xf32>
    %4 = vector.broadcast %cst_1 : f32 to vector<8x1xf32>
    %5 = arith.select %2, %3, %4 : vector<8x1xi1>, vector<8x1xf32>
    %c0_2 = arith.constant 0 : index
    %c0_3 = arith.constant 0 : index
    %6 = vector.load %arg2[%c0_2, %c0_3] : memref<8x1xf32, #tpu.memory_space<vmem>>, vector<8x1xf32>
    tpu.vector_store %arg2[%c0_2, %c0_3], %5 {strides = array<i32>} : memref<8x1xf32, #tpu.memory_space<vmem>>, vector<8x1xf32>,
    return
  }
  func.func @transform_0(%arg0: i32) -> (i32, i32) {
    %c0_i32 = arith.constant 0 : i32
    %c0_i32_0 = arith.constant 0 : i32
    return %arg0, %c0_i32 : i32, i32
  }
  func.func @transform_1(%arg0: i32) -> (i32, i32) {
    %c0_i32 = arith.constant 0 : i32
    %c0_i32_0 = arith.constant 0 : i32
    return %arg0, %c0_i32 : i32, i32
  }
}

</mosaic_0001>

<llo_original>
// kernel: tpu_custom_call.1
$region0: #{tpu_custom_call.1}
  #allocation0 [shape = 'u32[]', space=smem, size = 0x4, offset = 0x4, fixed_abs, tag = 'smem constant byte address 0x4 - core index']
  #allocation1 [shape = 'u32[144,128]{1,0:T(1,128)}', space=vmem, size = 0x12000, scoped, tag = 'internal scratch']
  %s0 = inlined_call_operand.hbm [shape: f32[8,9], index: 0, kind: input, shape index: {}]
  %s1 = inlined_call_operand.vmem [shape: f32[8,1], index: 1, kind: output, shape index: {}]
  %s2 = sld [smem:[#allocation0]]
  $region18: #{tpu_custom_call.1} parent=0
    _
  %s4 = ssub.s32 1, %s2
  %s5 = scalar_select 0, %s4, %s2
  $region1: #{tpu_custom_call.1} parent=0
    #allocation2 [shape = 'u8[4096]{0}', space=vmem, size = 0x1000, scoped, tag = 'input window, operand 0, single buffered']
    #allocation3 [shape = 's32[1]{0}', space=sflag, size = 0x4, scoped, tag = 'scoped memory for tpu_custom_call.1']
    %6 = vsyncpa [#allocation3], 0
    // Predicated region
    $region2: #{tpu_custom_call.1} parent=1 // pred_check
      _
    $region3: #{tpu_custom_call.1} parent=1 // pred_check_branch
      %8 = sbr.rel (0) target = $region5
    $region4: #{tpu_custom_call.1} parent=1 // pred_region
      %s10 = ssub.s32 128, 128
      %11 = vsyncadd [#allocation3], %s10
      %s13 = sshll.u32 [#allocation2], 4
      %s14 = int_to_ptr.vmem [resolvable:$true] %s13
      %16 = dma.hbm_to_vmem [thread:$0]  %s0, 128, %s14, [#allocation3]
    $region5: #{tpu_custom_call.1} parent=1 // pred_fallthru
      _
    // Predicated region
    $region6: #{tpu_custom_call.1} parent=1 // pred_check
      _
    $region7: #{tpu_custom_call.1} parent=1 // pred_check_branch
      %18 = sbr.rel (0) target = $region9
    $region8: #{tpu_custom_call.1} parent=1 // pred_region
      %19 = dma.done [#allocation3], 128
    $region9: #{tpu_custom_call.1} parent=1 // pred_fallthru
      _
    %v20 = vld [vmem:[#allocation2] sm:$0xff]
    %vm21 = vcmp.eq.f32.partialorder %v20, 0.0
    %v22 = vsel %vm21, 0.99, 0.01
    %24 = vrot.lane.b32.xlu0 %v22, 122
    %v25 = vpop.permute.xlu0 %24
    %vm27 = vcmask 7168
    %28 = vst.msk [vmem:[%s1] sm:$0xff] %vm27, %v25
    // Predicated region
    $region10: #{tpu_custom_call.1} parent=1 // pred_check
      _
    $region11: #{tpu_custom_call.1} parent=1 // pred_check_branch
      %30 = sbr.rel (0) target = $region13
    $region12: #{tpu_custom_call.1} parent=1 // pred_region
      _
    $region13: #{tpu_custom_call.1} parent=1 // pred_fallthru
      _
    // Predicated region
    $region14: #{tpu_custom_call.1} parent=1 // pred_check
      _
    $region15: #{tpu_custom_call.1} parent=1 // pred_check_branch
      %32 = sbr.rel (0) target = $region17
    $region16: #{tpu_custom_call.1} parent=1 // pred_region
      _
    $region17: #{tpu_custom_call.1} parent=1 // pred_fallthru
      _
    %33 = vsyncpa [#allocation3], 1

</llo_original>
